<compile_context>
chip_gen: v6e
topology: v6e:2x2x1
jax: 0.10.0
libtpu: 0.0.40
codegen_flags: <defaults>
</compile_context>

<pallas_src>
import functools

import jax
import jax.numpy as jnp
from jax.experimental import pallas as pl
from jax.experimental.pallas import tpu as pltpu


def _self_output_kernel(hs_ref, inp_ref, w_ref, b_ref, g_ref, beta_ref,
                        out_ref, acc_ref, *, eps, mxu_dtype):
    k = pl.program_id(1)

    @pl.when(k == 0)
    def _():
        acc_ref[...] = jnp.zeros_like(acc_ref)

    # Dense partial product for this K chunk: x_chunk @ W_chunk, f32 accumulate.
    x = hs_ref[...].astype(mxu_dtype)
    wt = w_ref[...].astype(mxu_dtype)
    acc_ref[...] += jnp.dot(x, wt, preferred_element_type=jnp.float32)

    @pl.when(k == pl.num_programs(1) - 1)
    def _():
        y = acc_ref[...] + b_ref[...].astype(jnp.float32)
        # Dropout: identity in eval mode.
        # TODO(synk): training-mode dropout (pltpu.prng_*) not implemented.
        y = y + inp_ref[...].astype(jnp.float32)
        mean = jnp.mean(y, axis=-1, keepdims=True)
        centered = y - mean
        var = jnp.mean(centered * centered, axis=-1, keepdims=True)
        normed = centered * jax.lax.rsqrt(var + eps)
        normed = (normed * g_ref[...].astype(jnp.float32)
                  + beta_ref[...].astype(jnp.float32))
        out_ref[...] = normed.astype(out_ref.dtype)


def _round_up(x, m):
    return ((x + m - 1) // m) * m


def _vmem_budget_and_limit():
    # Pure hardware probe: a failure just falls back to the conservative
    # 64-MiB-class (v7x) numbers. It never masks kernel compile errors.
    cap = None
    try:
        cap = getattr(pltpu.get_tpu_info(), "vmem_capacity_bytes", None)
    except Exception:
        cap = None
    if not cap or cap <= 0:
        cap = 64 * 1024 * 1024
    if cap > 64 * 1024 * 1024:                      # v5e / v6e: 128 MiB VMEM
        return 96 * 1024 * 1024, 100 * 1024 * 1024
    return 36 * 1024 * 1024, 48 * 1024 * 1024       # v7x: 64 MiB per TC


def _choose_tile_k(A, requested):
    """Largest multiple of 128 that divides A and is <= requested, else A."""
    if A <= requested or A % 128 != 0:
        return A
    best = A
    t = 128
    while t <= requested:
        if A % t == 0:
            best = t
        t += 128
    return best


def _vmem_estimate(tm, tk, H, hs_b, in_b, out_b, w_b):
    stream = 2 * tm * tk * hs_b + 2 * tm * H * (in_b + out_b)  # double-buffered tiles
    weight = 2 * tk * H * w_b                                   # double-buffered W chunk
    acc = tm * H * 4                                            # f32 accumulator scratch
    interm = 3 * tm * H * 4                                     # f32 LN temporaries
    params = 3 * 2 * H * 4                                      # bias / gamma / beta
    return stream + weight + acc + interm + params


def _choose_tile_m(M, tk, H, hs_b, in_b, out_b, w_b, requested, budget):
    # Sublane packing: 16-row granularity for 16-bit streamed dtypes, else 8.
    gran = 16 if min(hs_b, in_b, out_b) < 4 else 8

    def fits(t):
        return _vmem_estimate(t, tk, H, hs_b, in_b, out_b, w_b) <= budget

    tile = _round_up(max(1, min(requested, M)), gran)
    # Keep at least 2 grid steps so the parallel M axis can shard across both
    # TensorCores on v7x.
    if M > gran:
        tile = min(tile, max(_round_up(pl.cdiv(M, 2), gran), gran))
    # Shrink until the working set fits the VMEM budget.
    while tile > gran and not fits(tile):
        tile = max(gran, _round_up(tile // 2, gran))

    # Prefer an even M-step count so v7x's two TensorCores get balanced work
    # (harmless on the single-TC v5e/v6e).
    steps = pl.cdiv(M, tile)
    if steps > 1 and steps % 2 == 1:
        cand = max(gran, _round_up(pl.cdiv(M, steps + 1), gran))
        if cand <= tile and pl.cdiv(M, cand) % 2 == 0:
            tile = cand
    return tile


def long_skimformer_self_output(hidden_states, input_tensor, w, b, gamma, beta,
                                *, eps=1e-12, tile_m=512, tile_k=512,
                                mxu_dtype=None):
    """hidden_states: [B, S, all_head_size]; input_tensor: [B, S, hidden_size].

    w: [all_head_size, hidden_size] (transposed from PyTorch nn.Linear.weight).
    """
    B, S, A = hidden_states.shape
    H = input_tensor.shape[-1]
    M = B * S

    # MXU operand dtype: bf16 inputs stay bf16 (native MXU path); f32 inputs
    # keep f32 by default to preserve the module's numerics. Pass
    # mxu_dtype=jnp.bfloat16 explicitly to trade precision for MXU throughput.
    if mxu_dtype is None:
        mxu_dtype = (jnp.bfloat16
                     if jnp.dtype(hidden_states.dtype).itemsize <= 2
                     else jnp.float32)
    mxu_dtype = jnp.dtype(mxu_dtype)

    hs2d = hidden_states.reshape(M, A)
    in2d = input_tensor.reshape(M, H)
    w2d = w.astype(mxu_dtype)          # halves the weight's VMEM tile if bf16
    b2d = b.reshape(1, H)
    g2d = gamma.reshape(1, H)
    beta2d = beta.reshape(1, H)
    out_dtype = hidden_states.dtype

    hs_b = jnp.dtype(hs2d.dtype).itemsize
    in_b = jnp.dtype(in2d.dtype).itemsize
    out_b = jnp.dtype(out_dtype).itemsize
    w_b = jnp.dtype(w2d.dtype).itemsize

    budget, vmem_limit = _vmem_budget_and_limit()
    tk = _choose_tile_k(A, tile_k)
    tm = _choose_tile_m(M, tk, H, hs_b, in_b, out_b, w_b, tile_m, budget)

    grid_m = pl.cdiv(M, tm)   # ragged last block OK: rows independent, OOB
                              # output rows dropped by Pallas (no HBM pad/slice).
    grid_k = A // tk          # tk divides A exactly (reduction axis: no pad).

    cost = pl.CostEstimate(
        flops=2 * M * A * H,
        transcendentals=M,    # one rsqrt per row
        bytes_accessed=(M * A * hs_b + M * H * in_b + M * H * out_b
                        + grid_m * A * H * w_b + 3 * H * 4),
    )

    out = pl.pallas_call(
        functools.partial(_self_output_kernel, eps=eps, mxu_dtype=mxu_dtype),
        out_shape=jax.ShapeDtypeStruct((M, H), out_dtype),
        grid_spec=pltpu.PrefetchScalarGridSpec(
            num_scalar_prefetch=0,
            grid=(grid_m, grid_k),
            in_specs=[
                pl.BlockSpec((tm, tk), lambda i, k: (i, k)),   # hidden_states chunk
                pl.BlockSpec((tm, H), lambda i, k: (i, 0)),    # residual tile
                pl.BlockSpec((tk, H), lambda i, k: (k, 0)),    # dense weight chunk
                pl.BlockSpec((1, H), lambda i, k: (0, 0)),     # dense bias
                pl.BlockSpec((1, H), lambda i, k: (0, 0)),     # LN gamma
                pl.BlockSpec((1, H), lambda i, k: (0, 0)),     # LN beta
            ],
            out_specs=pl.BlockSpec((tm, H), lambda i, k: (i, 0)),
            scratch_shapes=[pltpu.VMEM((tm, H), jnp.float32)],  # f32 accumulator
        ),
        compiler_params=pltpu.CompilerParams(
            dimension_semantics=("parallel", "arbitrary"),
            vmem_limit_bytes=vmem_limit),
        cost_estimate=cost,
    )(hs2d, in2d, w2d, b2d, g2d, beta2d)

    return out.reshape(B, S, H)


def _reference(hidden_states, input_tensor, w, b, gamma, beta, eps=1e-12):
    y = jnp.einsum("bsa,ah->bsh", hidden_states.astype(jnp.float32),
                   w.astype(jnp.float32)) + b.astype(jnp.float32)
    y = y + input_tensor.astype(jnp.float32)
    mean = jnp.mean(y, axis=-1, keepdims=True)
    var = jnp.mean((y - mean) ** 2, axis=-1, keepdims=True)
    y = (y - mean) * jax.lax.rsqrt(var + eps)
    return (y * gamma.astype(jnp.float32) + beta.astype(jnp.float32)).astype(
        hidden_states.dtype)


if __name__ == "__main__":
    key = jax.random.PRNGKey(0)

    def run_case(case_key, B, S, num_heads, head_size, hidden, *,
                 dtype=jnp.float32, atol=3e-5, rtol=3e-5, **kw):
        all_head = num_heads * head_size
        k1, k2, k3, k4 = jax.random.split(case_key, 4)
        hidden_states = jax.random.normal(
            k1, (B, S, all_head), dtype=jnp.float32).astype(dtype)
        input_tensor = jax.random.normal(
            k2, (B, S, hidden), dtype=jnp.float32).astype(dtype)
        # Kernel-layout weight: [all_head, hidden].
        w = (jax.random.normal(k3, (all_head, hidden), dtype=jnp.float32)
             * 0.02).astype(dtype)
        bias = (jax.random.normal(k4, (hidden,), dtype=jnp.float32)
                * 0.01).astype(dtype)
        gamma = jnp.ones((hidden,), dtype=dtype)
        beta = jnp.zeros((hidden,), dtype=dtype)

        out = long_skimformer_self_output(hidden_states, input_tensor,
                                          w, bias, gamma, beta, **kw)
        out = jax.block_until_ready(out)
        ref = _reference(hidden_states, input_tensor, w, bias, gamma, beta)
        assert out.shape == (B, S, hidden)
        assert out.dtype == hidden_states.dtype
        err = float(jnp.max(jnp.abs(out.astype(jnp.float32)
                                    - ref.astype(jnp.float32))))
        assert jnp.allclose(out.astype(jnp.float32), ref.astype(jnp.float32),
                            atol=atol, rtol=rtol), err

    keys = jax.random.split(key, 4)
    # Small config: num_attention_heads=4, attention_head_size=8 -> all_head=32,
    # hidden_size=32, layer_norm_eps=1e-12, dropout (eval) = identity.
    run_case(keys[0], B=2, S=8, num_heads=4, head_size=8, hidden=32)
    # Ragged token count + lane-dense H=128: exercises the cdiv grid (no pad).
    run_case(keys[1], B=2, S=71, num_heads=2, head_size=64, hidden=128)
    # Multi-step K reduction (A=256, tile_k=128 -> 2 K steps) with accumulator.
    run_case(keys[2], B=2, S=64, num_heads=4, head_size=64, hidden=128,
             tile_k=128)
    # bf16 end-to-end: MXU gets native bf16 operands, f32 accumulation + LN.
    run_case(keys[3], B=2, S=64, num_heads=4, head_size=64, hidden=128,
             dtype=jnp.bfloat16, atol=5e-2, rtol=5e-2)

    print("KERNEL_OK")
</pallas_src>

<mosaic_0001>
module attributes {stable_mosaic.version = 11 : i64} {
  func.func @_self_output_kernel(%arg0: i32, %arg1: i32, %arg2: memref<8x32xf32, #tpu.memory_space<vmem>>, %arg3: memref<8x32xf32, #tpu.memory_space<vmem>>, %arg4: memref<32x32xf32, #tpu.memory_space<vmem>>, %arg5: memref<1x32xf32, #tpu.memory_space<vmem>>, %arg6: memref<1x32xf32, #tpu.memory_space<vmem>>, %arg7: memref<1x32xf32, #tpu.memory_space<vmem>>, %arg8: memref<8x32xf32, #tpu.memory_space<vmem>>, %arg9: memref<8x32xf32, #tpu.memory_space<vmem>>) attributes {dimension_semantics = [#tpu.dimension_semantics<parallel>, #tpu.dimension_semantics<arbitrary>], iteration_bounds = array<i64: 2, 1>, scalar_prefetch = 0 : i64, scratch_operands = 1 : i64, tpu.core_type = #tpu.core_type<tc>, window_params = [{transform_indices = @transform_0, window_bounds = array<i64: 8, 32>}, {transform_indices = @transform_1, window_bounds = array<i64: 8, 32>}, {transform_indices = @transform_2, window_bounds = array<i64: 32, 32>}, {pipeline_mode = #tpu.pipeline_mode<synchronous>, transform_indices = @transform_3, window_bounds = array<i64: 1, 32>}, {pipeline_mode = #tpu.pipeline_mode<synchronous>, transform_indices = @transform_4, window_bounds = array<i64: 1, 32>}, {pipeline_mode = #tpu.pipeline_mode<synchronous>, transform_indices = @transform_5, window_bounds = array<i64: 1, 32>}, {transform_indices = @transform_6, window_bounds = array<i64: 8, 32>}]} {
    %c0_i32 = arith.constant 0 : i32
    %0 = arith.cmpi eq, %arg1, %c0_i32 : i32
    %1 = arith.extui %0 : i1 to i32
    %c0_i32_0 = arith.constant 0 : i32
    %2 = arith.cmpi ne, %1, %c0_i32_0 : i32
    scf.if %2 {
      %cst_10 = arith.constant 0.000000e+00 : f32
      %12 = vector.broadcast %cst_10 : f32 to vector<8x32xf32>
      %c0_11 = arith.constant 0 : index
      %c0_12 = arith.constant 0 : index
      %13 = vector.load %arg9[%c0_11, %c0_12] : memref<8x32xf32, #tpu.memory_space<vmem>>, vector<8x32xf32>
      tpu.vector_store %arg9[%c0_11, %c0_12], %12 {strides = array<i32>} : memref<8x32xf32, #tpu.memory_space<vmem>>, vector<8x32xf32>,
    } else {
    }
    %c0 = arith.constant 0 : index
    %c0_1 = arith.constant 0 : index
    %3 = vector.load %arg2[%c0, %c0_1] : memref<8x32xf32, #tpu.memory_space<vmem>>, vector<8x32xf32>
    %c0_2 = arith.constant 0 : index
    %c0_3 = arith.constant 0 : index
    %4 = vector.load %arg4[%c0_2, %c0_3] : memref<32x32xf32, #tpu.memory_space<vmem>>, vector<32x32xf32>
    %c0_4 = arith.constant 0 : index
    %c0_5 = arith.constant 0 : index
    %5 = vector.load %arg9[%c0_4, %c0_5] : memref<8x32xf32, #tpu.memory_space<vmem>>, vector<8x32xf32>
    %cst = arith.constant dense<0.000000e+00> : vector<8x32xf32>
    %6 = tpu.matmul %3, %4, %cst {dimension_numbers = #tpu.dot_dimension_numbers<[1], [0], [0], [1], [0, 0, 1, 1], [], []>} : vector<8x32xf32>, vector<32x32xf32>, vector<8x32xf32> -> vector<8x32xf32>
    %7 = arith.addf %5, %6 : vector<8x32xf32>
    %c0_6 = arith.constant 0 : index
    %c0_7 = arith.constant 0 : index
    %8 = vector.load %arg9[%c0_6, %c0_7] : memref<8x32xf32, #tpu.memory_space<vmem>>, vector<8x32xf32>
    tpu.vector_store %arg9[%c0_6, %c0_7], %7 {strides = array<i32>} : memref<8x32xf32, #tpu.memory_space<vmem>>, vector<8x32xf32>,
    %c0_i32_8 = arith.constant 0 : i32
    %9 = arith.cmpi eq, %arg1, %c0_i32_8 : i32
    %10 = arith.extui %9 : i1 to i32
    %c0_i32_9 = arith.constant 0 : i32
    %11 = arith.cmpi ne, %10, %c0_i32_9 : i32
    scf.if %11 {
      %c0_10 = arith.constant 0 : index
      %c0_11 = arith.constant 0 : index
      %12 = vector.load %arg9[%c0_10, %c0_11] : memref<8x32xf32, #tpu.memory_space<vmem>>, vector<8x32xf32>
      %c0_12 = arith.constant 0 : index
      %c0_13 = arith.constant 0 : index
      %13 = vector.load %arg5[%c0_12, %c0_13] : memref<1x32xf32, #tpu.memory_space<vmem>>, vector<1x32xf32>
      %14 = vector.broadcast %13 : vector<1x32xf32> to vector<8x32xf32>
      %15 = arith.addf %12, %14 : vector<8x32xf32>
      %c0_14 = arith.constant 0 : index
      %c0_15 = arith.constant 0 : index
      %16 = vector.load %arg3[%c0_14, %c0_15] : memref<8x32xf32, #tpu.memory_space<vmem>>, vector<8x32xf32>
      %17 = arith.addf %15, %16 : vector<8x32xf32>
      %cst_16 = arith.constant dense<0.000000e+00> : vector<8xf32>
      %18 = vector.multi_reduction <add>, %17, %cst_16 [1] : vector<8x32xf32> to vector<8xf32>
      %19 = vector.shape_cast %18 : vector<8xf32> to vector<8x1xf32>
      %cst_17 = arith.constant 3.200000e+01 : f32
      %20 = vector.broadcast %cst_17 : f32 to vector<8x1xf32>
      %21 = arith.divf %19, %20 : vector<8x1xf32>
      %22 = vector.broadcast %21 : vector<8x1xf32> to vector<8x32xf32>
      %23 = arith.subf %17, %22 : vector<8x32xf32>
      %24 = arith.mulf %23, %23 : vector<8x32xf32>
      %cst_18 = arith.constant dense<0.000000e+00> : vector<8xf32>
      %25 = vector.multi_reduction <add>, %24, %cst_18 [1] : vector<8x32xf32> to vector<8xf32>
      %26 = vector.shape_cast %25 : vector<8xf32> to vector<8x1xf32>
      %cst_19 = arith.constant 3.200000e+01 : f32
      %27 = vector.broadcast %cst_19 : f32 to vector<8x1xf32>
      %28 = arith.divf %26, %27 : vector<8x1xf32>
      %cst_20 = arith.constant 9.99999996E-13 : f32
      %29 = vector.broadcast %cst_20 : f32 to vector<8x1xf32>
      %30 = arith.addf %28, %29 : vector<8x1xf32>
      %31 = math.rsqrt %30 : vector<8x1xf32>
      %32 = vector.broadcast %31 : vector<8x1xf32> to vector<8x32xf32>
      %33 = arith.mulf %23, %32 : vector<8x32xf32>
      %c0_21 = arith.constant 0 : index
      %c0_22 = arith.constant 0 : index
      %34 = vector.load %arg6[%c0_21, %c0_22] : memref<1x32xf32, #tpu.memory_space<vmem>>, vector<1x32xf32>
      %35 = vector.broadcast %34 : vector<1x32xf32> to vector<8x32xf32>
      %36 = arith.mulf %33, %35 : vector<8x32xf32>
      %c0_23 = arith.constant 0 : index
      %c0_24 = arith.constant 0 : index
      %37 = vector.load %arg7[%c0_23, %c0_24] : memref<1x32xf32, #tpu.memory_space<vmem>>, vector<1x32xf32>
      %38 = vector.broadcast %37 : vector<1x32xf32> to vector<8x32xf32>
      %39 = arith.addf %36, %38 : vector<8x32xf32>
      %c0_25 = arith.constant 0 : index
      %c0_26 = arith.constant 0 : index
      %40 = vector.load %arg8[%c0_25, %c0_26] : memref<8x32xf32, #tpu.memory_space<vmem>>, vector<8x32xf32>
      tpu.vector_store %arg8[%c0_25, %c0_26], %39 {strides = array<i32>} : memref<8x32xf32, #tpu.memory_space<vmem>>, vector<8x32xf32>,
    } else {
    }
    return
  }
  func.func @transform_0(%arg0: i32, %arg1: i32) -> (i32, i32) {
    %c0_i32 = arith.constant 0 : i32
    return %arg0, %arg1 : i32, i32
  }
  func.func @transform_1(%arg0: i32, %arg1: i32) -> (i32, i32) {
    %c0_i32 = arith.constant 0 : i32
    %c0_i32_0 = arith.constant 0 : i32
    return %arg0, %c0_i32 : i32, i32
  }
  func.func @transform_2(%arg0: i32, %arg1: i32) -> (i32, i32) {
    %c0_i32 = arith.constant 0 : i32
    %c0_i32_0 = arith.constant 0 : i32
    return %arg1, %c0_i32 : i32, i32
  }
  func.func @transform_3(%arg0: i32, %arg1: i32) -> (i32, i32) {
    %c0_i32 = arith.constant 0 : i32
    %c0_i32_0 = arith.constant 0 : i32
    %c0_i32_1 = arith.constant 0 : i32
    return %c0_i32, %c0_i32_0 : i32, i32
  }
  func.func @transform_4(%arg0: i32, %arg1: i32) -> (i32, i32) {
    %c0_i32 = arith.constant 0 : i32
    %c0_i32_0 = arith.constant 0 : i32
    %c0_i32_1 = arith.constant 0 : i32
    return %c0_i32, %c0_i32_0 : i32, i32
  }
  func.func @transform_5(%arg0: i32, %arg1: i32) -> (i32, i32) {
    %c0_i32 = arith.constant 0 : i32
    %c0_i32_0 = arith.constant 0 : i32
    %c0_i32_1 = arith.constant 0 : i32
    return %c0_i32, %c0_i32_0 : i32, i32
  }
  func.func @transform_6(%arg0: i32, %arg1: i32) -> (i32, i32) {
    %c0_i32 = arith.constant 0 : i32
    %c0_i32_0 = arith.constant 0 : i32
    return %arg0, %c0_i32 : i32, i32
  }
}

</mosaic_0001>

<llo_original>
// kernel: tpu_custom_call.1
$region0: #{tpu_custom_call.1}
  #allocation0 [shape = 'u32[]', space=smem, size = 0x4, offset = 0x4, fixed_abs, tag = 'smem constant byte address 0x4 - core index']
  #allocation1 [shape = 'u32[144,128]{1,0:T(1,128)}', space=vmem, size = 0x12000, scoped, tag = 'internal scratch']
  #allocation2 [shape = 'f32[8,32]{1,0:T(8,128)}', space=vmem, size = 0x1000, scoped, tag = 'scratch operand']
  %s0 = inlined_call_operand.hbm [shape: f32[16,32], index: 0, kind: input, shape index: {}]
  %s1 = inlined_call_operand.hbm [shape: f32[16,32], index: 1, kind: input, shape index: {}]
  %s2 = inlined_call_operand.hbm [shape: f32[32,32], index: 2, kind: input, shape index: {}]
  %s3 = inlined_call_operand.vmem [shape: f32[1,32], index: 3, kind: input, shape index: {}]
  %s4 = inlined_call_operand.vmem [shape: f32[1,32], index: 4, kind: input, shape index: {}]
  %s5 = inlined_call_operand.vmem [shape: f32[1,32], index: 5, kind: input, shape index: {}]
  %s6 = inlined_call_operand.hbm [shape: f32[16,32], index: 6, kind: output, shape index: {}]
  %s7 = sld [smem:[#allocation0]]
  $region77: #{tpu_custom_call.1} parent=0
    _
  %s9 = ssub.s32 1, %s7
  %s10 = scalar_select 0, %s9, %s7
  $region1: #{tpu_custom_call.1} parent=0
    #allocation3 [shape = 'u8[8192]{0}', space=vmem, size = 0x2000, scoped, tag = 'input window, operand 0']
    #allocation4 [shape = 's32[2]{0}', space=sflag, size = 0x8, scoped, tag = 'scoped memory for tpu_custom_call.1']
    #allocation5 [shape = 's32[2]{0}', space=sflag, size = 0x8, scoped, tag = 'scoped memory for tpu_custom_call.1']
    #allocation6 [shape = 'u8[8192]{0}', space=vmem, size = 0x2000, scoped, tag = 'input window, operand 1']
    #allocation7 [shape = 's32[2]{0}', space=sflag, size = 0x8, scoped, tag = 'scoped memory for tpu_custom_call.1']
    #allocation8 [shape = 'u8[16384]{0}', space=vmem, size = 0x4000, scoped, tag = 'input window, operand 2, single buffered']
    #allocation9 [shape = 'u8[8192]{0}', space=vmem, size = 0x2000, scoped, tag = 'output window, operand 0']
    %11 = vsyncpa [#allocation4], 0
    %s12 = scalar_lea.sflag [#allocation4], 1
    %13 = vsyncpa %s12, 0
    %14 = vsyncpa [#allocation7], 0
    %s15 = scalar_lea.sflag [#allocation7], 1
    %16 = vsyncpa %s15, 0
    %17 = vsyncpa [#allocation5], 0
    %s18 = scalar_lea.sflag [#allocation5], 1
    %19 = vsyncpa %s18, 0
    loop: start=0, step=1, limit=4
    $region2: #{tpu_custom_call.1} parent=1 // loop_pre_header
      _
    $region3: #{tpu_custom_call.1} parent=1 // loop_header
      %s21 = sphi 0, %s25
      %p22 = scmp.ge.s32.totalorder %s21, 4
      %s28 = sphi 0, %s40
      %s29 = sphi 0, %s36
      %s30 = sphi 0, %s28
      %s31 = sphi 0, %s29
      %s32 = sphi 0, %s30
      %s33 = sphi 0, %s31
      %s45 = sphi 0, %s47
      %s48 = sphi 0, %s45
      %s49 = sphi 0, %s48
      %s65 = sphi 0, %s49
      %s71 = sphi 0, %s73
      %s74 = sphi 0, %s71
      %s75 = sphi 0, %s74
      %s91 = sphi 0, %s75
      %s97 = sphi 0, %s99
      %s100 = sphi 0, %s97
      %s101 = sphi 0, %s100
      %s117 = sphi 0, %s101
      %s121 = sphi 0, %s121
      %s123 = sphi 0, %s121
      %s124 = sphi 0, %s123
      %s138 = sphi 0, %s124
      %s142 = sphi 0, %s142
      %s144 = sphi 0, %s142
      %s145 = sphi 0, %s144
      %s159 = sphi 0, %s145
      %s163 = sphi 0, %s163
      %s165 = sphi 0, %s163
      %s166 = sphi 0, %s165
      %s180 = sphi 0, %s166
      %s186 = sphi 0, %s188
      %s189 = sphi 0, %s186
      %s190 = sphi 0, %s189
      %s206 = sphi 0, %s190
    $region4: #{tpu_custom_call.1} parent=1 // loop_header_branch
      %24 = sbr.rel (%p22) target = $region8
    $region5: #{tpu_custom_call.1} parent=1 // loop_body
      %s26 = ssub.s32 %s21, 1
      %s27 = ssub.s32 %s21, 2
      %s34 = sadd.s32 1, %s29
      %p35 = scmp.ge.s32.totalorder %s34, 1
      %s36 = scalar_select %p35, 0, %s34
      %s37 = sadd.s32 1, %s28
      %s38 = scalar_select %p35, %s37, %s28
      %p39 = scmp.ge.s32.totalorder %s38, 2
      %s40 = scalar_select %p39, 0, %s38
      %s41 = ssub.s32 %s28, %s40
      %s42 = ssub.s32 %s29, %s36
      %s43 = sor.u32 %s41, %s42
      %p44 = scmp.eq.s32.totalorder %s43, 0
      %s46 = sadd.s32 %s45, 1
      %s47 = scalar_select %p44, %s45, %s46
      %p50 = pneg %p44
      %p51 = scmp.eq.s32.totalorder %s21, 1
      %p52 = por %p50, %p51
      %p53 = scmp.ne.s32.totalorder %s45, %s48
      %p54 = scmp.eq.s32.totalorder %s21, 0
      %p55 = por %p53, %p54
      %p56 = scmp.ne.s32.totalorder %s45, %s48
      %p57 = scmp.eq.s32.totalorder %s26, 1
      %p58 = por %p56, %p57
      %p59 = scmp.ne.s32.totalorder %s48, %s49
      %p60 = scmp.eq.s32.totalorder %s26, 0
      %p61 = por %p59, %p60
      %p62 = scmp.ne.s32.totalorder %s48, %s49
      %p63 = scmp.eq.s32.totalorder %s27, 1
      %p64 = por %p62, %p63
      %p66 = scmp.ne.s32.totalorder %s49, %s65
      %p67 = scmp.eq.s32.totalorder %s27, 0
      %p68 = por %p66, %p67
      %s69 = ssub.s32 %s28, %s40
      %p70 = scmp.eq.s32.totalorder %s69, 0
      %s72 = sadd.s32 %s71, 1
      %s73 = scalar_select %p70, %s71, %s72
      %p76 = pneg %p70
      %p77 = scmp.eq.s32.totalorder %s21, 1
      %p78 = por %p76, %p77
      %p79 = scmp.ne.s32.totalorder %s71, %s74
      %p80 = scmp.eq.s32.totalorder %s21, 0
      %p81 = por %p79, %p80
      %p82 = scmp.ne.s32.totalorder %s71, %s74
      %p83 = scmp.eq.s32.totalorder %s26, 1
      %p84 = por %p82, %p83
      %p85 = scmp.ne.s32.totalorder %s74, %s75
      %p86 = scmp.eq.s32.totalorder %s26, 0
      %p87 = por %p85, %p86
      %p88 = scmp.ne.s32.totalorder %s74, %s75
      %p89 = scmp.eq.s32.totalorder %s27, 1
      %p90 = por %p88, %p89
      %p92 = scmp.ne.s32.totalorder %s75, %s91
      %p93 = scmp.eq.s32.totalorder %s27, 0
      %p94 = por %p92, %p93
      %s95 = ssub.s32 %s29, %s36
      %p96 = scmp.eq.s32.totalorder %s95, 0
      %s98 = sadd.s32 %s97, 1
      %s99 = scalar_select %p96, %s97, %s98
      %p102 = pneg %p96
      %p103 = scmp.eq.s32.totalorder %s21, 1
      %p104 = por %p102, %p103
      %p105 = scmp.ne.s32.totalorder %s97, %s100
      %p106 = scmp.eq.s32.totalorder %s21, 0
      %p107 = por %p105, %p106
      %p108 = scmp.ne.s32.totalorder %s97, %s100
      %p109 = scmp.eq.s32.totalorder %s26, 1
      %p110 = por %p108, %p109
      %p111 = scmp.ne.s32.totalorder %s100, %s101
      %p112 = scmp.eq.s32.totalorder %s26, 0
      %p113 = por %p111, %p112
      %p114 = scmp.ne.s32.totalorder %s100, %s101
      %p115 = scmp.eq.s32.totalorder %s27, 1
      %p116 = por %p114, %p115
      %p118 = scmp.ne.s32.totalorder %s101, %s117
      %p119 = scmp.eq.s32.totalorder %s27, 0
      %p120 = por %p118, %p119
      %s122 = sadd.s32 %s121, 1
      %p125 = scmp.eq.s32.totalorder %s21, 1
      %p126 = scmp.ne.s32.totalorder %s121, %s123
      %p127 = scmp.eq.s32.totalorder %s21, 0
      %p128 = por %p126, %p127
      %p129 = scmp.ne.s32.totalorder %s121, %s123
      %p130 = scmp.eq.s32.totalorder %s26, 1
      %p131 = por %p129, %p130
      %p132 = scmp.ne.s32.totalorder %s123, %s124
      %p133 = scmp.eq.s32.totalorder %s26, 0
      %p134 = por %p132, %p133
      %p135 = scmp.ne.s32.totalorder %s123, %s124
      %p136 = scmp.eq.s32.totalorder %s27, 1
      %p137 = por %p135, %p136
      %p139 = scmp.ne.s32.totalorder %s124, %s138
      %p140 = scmp.eq.s32.totalorder %s27, 0
      %p141 = por %p139, %p140
      %s143 = sadd.s32 %s142, 1
      %p146 = scmp.eq.s32.totalorder %s21, 1
      %p147 = scmp.ne.s32.totalorder %s142, %s144
      %p148 = scmp.eq.s32.totalorder %s21, 0
      %p149 = por %p147, %p148
      %p150 = scmp.ne.s32.totalorder %s142, %s144
      %p151 = scmp.eq.s32.totalorder %s26, 1
      %p152 = por %p150, %p151
      %p153 = scmp.ne.s32.totalorder %s144, %s145
      %p154 = scmp.eq.s32.totalorder %s26, 0
      %p155 = por %p153, %p154
      %p156 = scmp.ne.s32.totalorder %s144, %s145
      %p157 = scmp.eq.s32.totalorder %s27, 1
      %p158 = por %p156, %p157
      %p160 = scmp.ne.s32.totalorder %s145, %s159
      %p161 = scmp.eq.s32.totalorder %s27, 0
      %p162 = por %p160, %p161
      %s164 = sadd.s32 %s163, 1
      %p167 = scmp.eq.s32.totalorder %s21, 1
      %p168 = scmp.ne.s32.totalorder %s163, %s165
      %p169 = scmp.eq.s32.totalorder %s21, 0
      %p170 = por %p168, %p169
      %p171 = scmp.ne.s32.totalorder %s163, %s165
      %p172 = scmp.eq.s32.totalorder %s26, 1
      %p173 = por %p171, %p172
      %p174 = scmp.ne.s32.totalorder %s165, %s166
      %p175 = scmp.eq.s32.totalorder %s26, 0
      %p176 = por %p174, %p175
      %p177 = scmp.ne.s32.totalorder %s165, %s166
      %p178 = scmp.eq.s32.totalorder %s27, 1
      %p179 = por %p177, %p178
      %p181 = scmp.ne.s32.totalorder %s166, %s180
      %p182 = scmp.eq.s32.totalorder %s27, 0
      %p183 = por %p181, %p182
      %s184 = ssub.s32 %s28, %s40
      %p185 = scmp.eq.s32.totalorder %s184, 0
      %s187 = sadd.s32 %s186, 1
      %s188 = scalar_select %p185, %s186, %s187
      %p191 = pneg %p185
      %p192 = scmp.eq.s32.totalorder %s21, 1
      %p193 = por %p191, %p192
      %p194 = scmp.ne.s32.totalorder %s186, %s189
      %p195 = scmp.eq.s32.totalorder %s21, 0
      %p196 = por %p194, %p195
      %p197 = scmp.ne.s32.totalorder %s186, %s189
      %p198 = scmp.eq.s32.totalorder %s26, 1
      %p199 = por %p197, %p198
      %p200 = scmp.ne.s32.totalorder %s189, %s190
      %p201 = scmp.eq.s32.totalorder %s26, 0
      %p202 = por %p200, %p201
      %p203 = scmp.ne.s32.totalorder %s189, %s190
      %p204 = scmp.eq.s32.totalorder %s27, 1
      %p205 = por %p203, %p204
      %p207 = scmp.ne.s32.totalorder %s190, %s206
      %p208 = scmp.eq.s32.totalorder %s27, 0
      %p209 = por %p207, %p208
      %p210 = scmp.le.s32.totalorder 1, %s21
      %p211 = scmp.lt.s32.totalorder %s21, 3
      %p212 = pnand %p210, %p211
      %p213 = pneg %p212
      // Predicated region
      $region9: #{tpu_custom_call.1} parent=5 // pred_check
        _
      $region10: #{tpu_custom_call.1} parent=5 // pred_check_branch
        %215 = sbr.rel (%p212) target = $region12
      $region11: #{tpu_custom_call.1} parent=5 // pred_region
        %s216 = ssub.s32 %s21, 1
        // Predicated region
        $region13: #{tpu_custom_call.1} parent=11 // pred_check
          %p217 = pneg %p113
        $region14: #{tpu_custom_call.1} parent=11 // pred_check_branch
          %219 = sbr.rel (%p217) target = $region16
        $region15: #{tpu_custom_call.1} parent=11 // pred_region
          %s220 = smul.u32 4, %s31
          %s222 = ssub.s32 512, 512
          %223 = vsyncadd [#allocation7], %s222
          %s224 = smul.addr %s220, 128
          %s225 = scalar_lea.hbm %s2, %s224
          %s226 = sshll.u32 [#allocation8], 4
          %s227 = int_to_ptr.vmem [resolvable:$true] %s226
          %232 = dma.hbm_to_vmem [thread:$0]  %s225, 512, %s227, [#allocation7], 128, 128, 8
        $region16: #{tpu_custom_call.1} parent=11 // pred_fallthru
          _
        // Predicated region
        $region17: #{tpu_custom_call.1} parent=11 // pred_check
          %p233 = pneg %p134
        $region18: #{tpu_custom_call.1} parent=11 // pred_check_branch
          %235 = sbr.rel (%p233) target = $region20
        $region19: #{tpu_custom_call.1} parent=11 // pred_region
          _
        $region20: #{tpu_custom_call.1} parent=11 // pred_fallthru
          _
        // Predicated region
        $region21: #{tpu_custom_call.1} parent=11 // pred_check
          %p236 = pneg %p155
        $region22: #{tpu_custom_call.1} parent=11 // pred_check_branch
          %238 = sbr.rel (%p236) target = $region24
        $region23: #{tpu_custom_call.1} parent=11 // pred_region
          _
        $region24: #{tpu_custom_call.1} parent=11 // pred_fallthru
          _
        // Predicated region
        $region25: #{tpu_custom_call.1} parent=11 // pred_check
          %p239 = pneg %p176
        $region26: #{tpu_custom_call.1} parent=11 // pred_check_branch
          %241 = sbr.rel (%p239) target = $region28
        $region27: #{tpu_custom_call.1} parent=11 // pred_region
          _
        $region28: #{tpu_custom_call.1} parent=11 // pred_fallthru
          _
      $region12: #{tpu_custom_call.1} parent=5 // pred_fallthru
        _
      %p242 = scmp.lt.s32.totalorder %s21, 2
      // Predicated region
      $region29: #{tpu_custom_call.1} parent=5 // pred_check
        %p243 = pneg %p242
      $region30: #{tpu_custom_call.1} parent=5 // pred_check_branch
        %245 = sbr.rel (%p243) target = $region32
      $region31: #{tpu_custom_call.1} parent=5 // pred_region
        // Predicated region
        $region33: #{tpu_custom_call.1} parent=31 // pred_check
          %p246 = pneg %p55
        $region34: #{tpu_custom_call.1} parent=31 // pred_check_branch
          %248 = sbr.rel (%p246) target = $region36
        $region35: #{tpu_custom_call.1} parent=31 // pred_region
          %s249 = sand.u32 %s45, 1
          %s250 = scalar_lea.sflag [#allocation4], %s249
          %s251 = sand.u32 %s45, 1
          %s252 = smul.addr %s251, 8
          %s253 = scalar_lea.vmem [#allocation3], %s252
          %s255 = ssub.s32 128, 128
          %256 = vsyncadd %s250, %s255
          %s257 = sadd.s32 %s29, %s28
          %s258 = smul.addr %s257, 128
          %s259 = scalar_lea.hbm %s0, %s258
          %s261 = sshll.u32 %s253, 4
          %s262 = int_to_ptr.vmem [resolvable:$true] %s261
          %264 = dma.hbm_to_vmem [thread:$0]  %s259, 128, %s262, %s250
        $region36: #{tpu_custom_call.1} parent=31 // pred_fallthru
          _
        // Predicated region
        $region37: #{tpu_custom_call.1} parent=31 // pred_check
          %p265 = pneg %p81
        $region38: #{tpu_custom_call.1} parent=31 // pred_check_branch
          %267 = sbr.rel (%p265) target = $region40
        $region39: #{tpu_custom_call.1} parent=31 // pred_region
          %s268 = sand.u32 %s21, 1
          %s269 = scalar_lea.sflag [#allocation7], %s268
          %s270 = sand.u32 %s71, 1
          %s271 = smul.addr %s270, 8
          %s272 = scalar_lea.vmem [#allocation6], %s271
          %s274 = ssub.s32 128, 128
          %275 = vsyncadd %s269, %s274
          %s276 = smul.addr %s28, 128
          %s277 = scalar_lea.hbm %s1, %s276
          %s279 = sshll.u32 %s272, 4
          %s280 = int_to_ptr.vmem [resolvable:$true] %s279
          %282 = dma.hbm_to_vmem [thread:$0]  %s277, 128, %s280, %s269
        $region40: #{tpu_custom_call.1} parent=31 // pred_fallthru
          _
      $region32: #{tpu_custom_call.1} parent=5 // pred_fallthru
        _
      %p283 = scmp.le.s32.totalorder 1, %s21
      %p284 = scmp.lt.s32.totalorder %s21, 3
      %p285 = pnand %p283, %p284
      %p286 = pneg %p285
      // Predicated region
      $region41: #{tpu_custom_call.1} parent=5 // pred_check
        _
      $region42: #{tpu_custom_call.1} parent=5 // pred_check_branch
        %288 = sbr.rel (%p285) target = $region44
      $region43: #{tpu_custom_call.1} parent=5 // pred_region
        %s289 = ssub.s32 %s21, 1
        %s290 = sand.u32 %s48, 1
        %s291 = scalar_lea.sflag [#allocation4], %s290
        %s292 = sand.u32 %s48, 1
        %s293 = smul.addr %s292, 8
        %s294 = scalar_lea.vmem [#allocation3], %s293
        // Predicated region
        $region45: #{tpu_custom_call.1} parent=43 // pred_check
          %p295 = pneg %p61
        $region46: #{tpu_custom_call.1} parent=43 // pred_check_branch
          %297 = sbr.rel (%p295) target = $region48
        $region47: #{tpu_custom_call.1} parent=43 // pred_region
          %298 = dma.done %s291, 128
        $region48: #{tpu_custom_call.1} parent=43 // pred_fallthru
          _
        %s299 = sand.u32 %s26, 1
        %s300 = scalar_lea.sflag [#allocation7], %s299
        %s301 = sand.u32 %s74, 1
        %s302 = smul.addr %s301, 8
        %s303 = scalar_lea.vmem [#allocation6], %s302
        // Predicated region
        $region49: #{tpu_custom_call.1} parent=43 // pred_check
          %p304 = pneg %p87
        $region50: #{tpu_custom_call.1} parent=43 // pred_check_branch
          %306 = sbr.rel (%p304) target = $region52
        $region51: #{tpu_custom_call.1} parent=43 // pred_region
          %307 = dma.done %s300, 128
        $region52: #{tpu_custom_call.1} parent=43 // pred_fallthru
          _
        // Predicated region
        $region53: #{tpu_custom_call.1} parent=43 // pred_check
          %p308 = pneg %p113
        $region54: #{tpu_custom_call.1} parent=43 // pred_check_branch
          %310 = sbr.rel (%p308) target = $region56
        $region55: #{tpu_custom_call.1} parent=43 // pred_region
          %311 = dma.done [#allocation7], 512
        $region56: #{tpu_custom_call.1} parent=43 // pred_fallthru
          _
        %s312 = sand.u32 %s48, 1
        %s313 = scalar_lea.sflag [#allocation4], %s312
        %s314 = sand.u32 %s48, 1
        %s315 = smul.addr %s314, 8
        %s316 = scalar_lea.vmem [#allocation3], %s315
        %p317 = pneg %p61
        %p318 = pneg %p58
        %s319 = sand.u32 %s26, 1
        %s320 = scalar_lea.sflag [#allocation7], %s319
        %s321 = sand.u32 %s74, 1
        %s322 = smul.addr %s321, 8
        %s323 = scalar_lea.vmem [#allocation6], %s322
        %p324 = pneg %p87
        %p325 = pneg %p84
        %p326 = pneg %p113
        %p327 = pneg %p110
        %p328 = pneg %p134
        %p329 = pneg %p131
        %p330 = pneg %p155
        %p331 = pneg %p152
        %p332 = pneg %p176
        %p333 = pneg %p173
        %p334 = pneg %p202
        %p335 = pneg %p199
        %s336 = sand.u32 %s189, 1
        %s337 = scalar_lea.sflag [#allocation5], %s336
        %s338 = sand.u32 %s189, 1
        %s339 = smul.addr %s338, 8
        %s340 = scalar_lea.vmem [#allocation9], %s339
        %s341 = smul.u32 4, %s31
        %p342 = scmp.eq.s32.totalorder %s31, 0
        // Predicated region
        $region57: #{tpu_custom_call.1} parent=43 // pred_check
          %p343 = pneg %p342
        $region58: #{tpu_custom_call.1} parent=43 // pred_check_branch
          %345 = sbr.rel (%p343) target = $region60
        $region59: #{tpu_custom_call.1} parent=43 // pred_region
          %vm346 = vcmask 261120
          %347 = vst.msk [vmem:[#allocation2] sm:$0xff] %vm346, 0.0
        $region60: #{tpu_custom_call.1} parent=43 // pred_fallthru
          _
        %v348 = vld [vmem:[%s294] sm:$0xff]
        %v349 = vld [vmem:[#allocation8] sm:$0xff]
        %v350 = vld [vmem:[#allocation8 + $0x8] sm:$0xff]
        %v351 = vld [vmem:[#allocation8 + $0x10] sm:$0xff]
        %v352 = vld [vmem:[#allocation8 + $0x18] sm:$0xff]
        %v353 = vld [vmem:[#allocation2] sm:$0xff]
        %vm354 = vcmask 261120
        %v356 = vsel %vm354, %v348, 0
        %358 = vmatprep.subr.mxu0 0.0
        %359 = vmatpush1.msra.mxu0 0.0
        %360 = vmatprep.subr.mxu0 0.0
        %361 = vmatpush1.msra.mxu0 0.0
        %362 = vmatprep.subr.mxu0 0.0
        %363 = vmatpush1.msra.mxu0 0.0
        %364 = vmatprep.subr.mxu0 0.0
        %365 = vmatpush1.msra.mxu0 0.0
        %366 = vmatprep.subr.mxu0 0.0
        %367 = vmatpush1.msra.mxu0 0.0
        %368 = vmatprep.subr.mxu0 0.0
        %369 = vmatpush1.msra.mxu0 0.0
        %370 = vmatprep.subr.mxu0 0.0
        %371 = vmatpush1.msra.mxu0 0.0
        %372 = vmatprep.subr.mxu0 0.0
        %373 = vmatpush1.msra.mxu0 0.0
        %374 = vmatprep.subr.mxu0 0.0
        %375 = vmatpush1.msra.mxu0 0.0
        %376 = vmatprep.subr.mxu0 0.0
        %377 = vmatpush1.msra.mxu0 0.0
        %378 = vmatprep.subr.mxu0 0.0
        %379 = vmatpush1.msra.mxu0 0.0
        %380 = vmatprep.subr.mxu0 0.0
        %381 = vmatpush1.msra.mxu0 0.0
        %382 = vmatprep.subr.mxu0 0.0
        %383 = vmatpush1.msra.mxu0 %v352
        %384 = vmatprep.subr.mxu0 0.0
        %385 = vmatpush1.msra.mxu0 %v351
        %386 = vmatprep.subr.mxu0 0.0
        %387 = vmatpush1.msra.mxu0 %v350
        %388 = vmatprep.subr.mxu0 0.0
        %389 = vmatpush1.msra.mxu0 %v349
        %390 = vmatprep.subr.mxu0 0.0
        %391 = vmatpush2.msra.mxu0 0.0
        %392 = vmatprep.subr.mxu0 0.0
        %393 = vmatpush2.msra.mxu0 0.0
        %394 = vmatprep.subr.mxu0 0.0
        %395 = vmatpush2.msra.mxu0 0.0
        %396 = vmatprep.subr.mxu0 0.0
        %397 = vmatpush2.msra.mxu0 0.0
        %398 = vmatprep.subr.mxu0 0.0
        %399 = vmatpush2.msra.mxu0 0.0
        %400 = vmatprep.subr.mxu0 0.0
        %401 = vmatpush2.msra.mxu0 0.0
        %402 = vmatprep.subr.mxu0 0.0
        %403 = vmatpush2.msra.mxu0 0.0
        %404 = vmatprep.subr.mxu0 0.0
        %405 = vmatpush2.msra.mxu0 0.0
        %406 = vmatprep.subr.mxu0 0.0
        %407 = vmatpush2.msra.mxu0 0.0
        %408 = vmatprep.subr.mxu0 0.0
        %409 = vmatpush2.msra.mxu0 0.0
        %410 = vmatprep.subr.mxu0 0.0
        %411 = vmatpush2.msra.mxu0 0.0
        %412 = vmatprep.subr.mxu0 0.0
        %413 = vmatpush2.msra.mxu0 0.0
        %414 = vmatprep.subr.mxu0 0.0
        %415 = vmatpush2.msra.mxu0 0.0
        %416 = vmatprep.subr.mxu0 0.0
        %417 = vmatpush2.msra.mxu0 0.0
        %418 = vmatprep.subr.mxu0 0.0
        %419 = vmatpush2.msra.mxu0 0.0
        %420 = vmatprep.subr.mxu0 0.0
        %421 = vmatpush2.msra.mxu0 0.0
        %422 = vmatprep.mubr.f32.mxu0 0.0
        %423 = vmatmul.mubr.f32.gmra.mxu0 %v356
        %v424 = vpop.f32.mrf.mxu0
        %v425 = vadd.f32 0.0, %v424
        %v426 = vpop.f32.mrf.mxu0
        %427 = vdwg.mxu0
        %v428 = vadd.f32 %v353, %v425
        %429 = vst.msk [vmem:[#allocation2] sm:$0xff] %vm354, %v428
        // Predicated region
        $region61: #{tpu_custom_call.1} parent=43 // pred_check
          %p430 = pneg %p342
        $region62: #{tpu_custom_call.1} parent=43 // pred_check_branch
          %432 = sbr.rel (%p430) target = $region64
        $region63: #{tpu_custom_call.1} parent=43 // pred_region
          %v433 = vld [vmem:[#allocation2] sm:$0xff]
          %v434 = vld [vmem:[%s3] sm:$0x1]
          %v436 = vlaneseq
          %v437 = vshrl.u32 %v436, 7
          %v438 = vsub.s32 0, %v437
          %v439 = vrot.slane %v434, %v438
          %v441 = vadd.f32 %v433, %v439
          %v442 = vld [vmem:[%s303] sm:$0xff]
          %v443 = vadd.f32 %v441, %v442
          %v444 = vsel %vm354, %v443, 0.0
          %445 = vadd.xlane.f32.xlu0 %v444
          %v446 = vpop.xlane.xlu0 %445
          %v447 = vrcp.pop 32.0
          %v448 = vmul.f32 %v446, %v447
          %v449 = vsub.f32 %v443, %v448
          %v450 = vmul.f32 %v449, %v449
          %v451 = vsel %vm354, %v450, 0.0
          %452 = vadd.xlane.f32.xlu0 %v451
          %v453 = vpop.xlane.xlu0 %452
          %v454 = vmul.f32 %v453, %v447
          %v455 = vadd.f32 %v454, 1e-12
          %v456 = vrsqrt.pop %v455
          %v457 = vmul.f32 %v449, %v456
          %v458 = vld [vmem:[%s4] sm:$0x1]
          %v460 = vlaneseq
          %v461 = vshrl.u32 %v460, 7
          %v462 = vsub.s32 0, %v461
          %v463 = vrot.slane %v458, %v462
          %v465 = vmul.f32 %v457, %v463
          %v466 = vld [vmem:[%s5] sm:$0x1]
          %v468 = vlaneseq
          %v469 = vshrl.u32 %v468, 7
          %v470 = vsub.s32 0, %v469
          %v471 = vrot.slane %v466, %v470
          %v473 = vadd.f32 %v465, %v471
          %474 = vst.msk [vmem:[%s340] sm:$0xff] %vm354, %v473
        $region64: #{tpu_custom_call.1} parent=43 // pred_fallthru
          _
        %s475 = sand.u32 %s189, 1
        %s476 = scalar_lea.sflag [#allocation5], %s475
        %s477 = sand.u32 %s189, 1
        %s478 = smul.addr %s477, 8
        %s479 = scalar_lea.vmem [#allocation9], %s478
        // Predicated region
        $region65: #{tpu_custom_call.1} parent=43 // pred_check
          %p480 = pneg %p199
        $region66: #{tpu_custom_call.1} parent=43 // pred_check_branch
          %482 = sbr.rel (%p480) target = $region68
        $region67: #{tpu_custom_call.1} parent=43 // pred_region
          %s484 = ssub.s32 128, 128
          %485 = vsyncadd %s476, %s484
          %s486 = smul.addr %s30, 128
          %s487 = scalar_lea.hbm %s6, %s486
          %s489 = sshll.u32 %s479, 4
          %s490 = int_to_ptr.vmem [resolvable:$true] %s489
          %492 = dma.vmem_to_hbm [thread:$0]  %s490, 128, %s487, %s476
        $region68: #{tpu_custom_call.1} parent=43 // pred_fallthru
          _
      $region44: #{tpu_custom_call.1} parent=5 // pred_fallthru
        _
      %p493 = scmp.le.s32.totalorder 2, %s21
      // Predicated region
      $region69: #{tpu_custom_call.1} parent=5 // pred_check
        %p494 = pneg %p493
      $region70: #{tpu_custom_call.1} parent=5 // pred_check_branch
        %496 = sbr.rel (%p494) target = $region72
      $region71: #{tpu_custom_call.1} parent=5 // pred_region
        %s497 = ssub.s32 %s21, 2
        // Predicated region
        $region73: #{tpu_custom_call.1} parent=71 // pred_check
          %p498 = pneg %p205
        $region74: #{tpu_custom_call.1} parent=71 // pred_check_branch
          %500 = sbr.rel (%p498) target = $region76
        $region75: #{tpu_custom_call.1} parent=71 // pred_region
          %s501 = sand.u32 %s190, 1
          %s502 = scalar_lea.sflag [#allocation5], %s501
          %s503 = sand.u32 %s190, 1
          %s504 = smul.addr %s503, 8
          %s505 = scalar_lea.vmem [#allocation9], %s504
          %506 = dma.done %s502, 128
        $region76: #{tpu_custom_call.1} parent=71 // pred_fallthru
          _
      $region72: #{tpu_custom_call.1} parent=5 // pred_fallthru
        _
    $region6: #{tpu_custom_call.1} parent=1 // loop_footer
      %s25 = sadd.s32 1, %s21
    $region7: #{tpu_custom_call.1} parent=1 // loop_footer_branch
      %20 = sbr.rel target = $region3
    $region8: #{tpu_custom_call.1} parent=1 // loop_exit
      _
    %507 = vsyncpa [#allocation4], 1
    %s508 = scalar_lea.sflag [#allocation4], 1
    %509 = vsyncpa %s508, 1
    %510 = vsyncpa [#allocation7], 1
    %s511 = scalar_lea.sflag [#allocation7], 1
    %512 = vsyncpa %s511, 1
    %513 = vsyncpa [#allocation5], 1
    %s514 = scalar_lea.sflag [#allocation5], 1
    %515 = vsyncpa %s514, 1

</llo_original>
